<compile_context>
chip_gen: v7x
topology: tpu7x:2x2x1
jax: 0.10.0
libtpu: 0.0.40
codegen_flags: <defaults>
</compile_context>

<pallas_src>
import jax
import jax.numpy as jnp
from jax.experimental import pallas as pl
from jax.experimental.pallas import tpu as pltpu


def _round_up(x, m):
    return ((x + m - 1) // m) * m


# ---------------------------------------------------------------------------
# Fused kernel: both MLPs, packed hidden (H1+H2) and packed output (z1|z2).
# ---------------------------------------------------------------------------
def _hidden_kernel(x_ref, g_ref, w1x_ref, wg_ref, b1_ref, w2_ref, b2_ref,
                   z_ref):
    # Packed layer-1 pre-activation over (TB, H1+H2):
    #   cols [0:2*concat)         -> hidden1 pre-act (x part + g part + b1)
    #   cols [H1:H1+2*G_dim)      -> hidden2 pre-act (g part + c1)
    #   all padding columns       -> exactly 0
    h = (jnp.dot(x_ref[...], w1x_ref[...], preferred_element_type=jnp.float32)
         + jnp.dot(g_ref[...], wg_ref[...], preferred_element_type=jnp.float32)
         + b1_ref[...])
    h = jnp.maximum(h, 0.01 * h)                       # LeakyReLU(0.01)

    # Packed layer-2: single (TB, H1+H2) @ (H1+H2, ZP) matmul against the
    # block-diagonal weight -> cols [0:z1) hold z1, cols [z1:z1+z2) hold z2.
    z = jnp.dot(h, w2_ref[...], preferred_element_type=jnp.float32) + b2_ref[...]
    z_ref[...] = z.astype(z_ref.dtype)


# ---------------------------------------------------------------------------
# Wrapper: batch-tiled single pallas_call producing the packed padded output.
# ---------------------------------------------------------------------------
def hidden_forward_packed(X, G, params, *, max_tile=1024, out_dtype=None):
    """Returns packed output (Bp, ZP); cols [0:z1) = z1, [z1:z1+z2) = z2.

    Consumers that can, should consume this packed slab directly (fusing any
    slice into their own jit) instead of materializing sliced z1/z2 arrays.
    """
    B, X_dim = X.shape
    G_dim = G.shape[1]
    out_dtype = X.dtype if out_dtype is None else out_dtype  # bf16 halves writeback on v5e

    # Batch tile: multiple of 8 sublanes; ensure >=2 grid steps when Bp > 8
    # so the "parallel" batch axis shards across both v7x TensorCores.
    Bp8 = _round_up(max(B, 8), 8)
    if Bp8 <= 8:
        TB = Bp8
    else:
        TB = min(max_tile, _round_up(pl.cdiv(Bp8, 2), 8))
    Bp = _round_up(Bp8, TB)
    if Bp != B:
        X = jnp.pad(X, ((0, Bp - B), (0, 0)))
        G = jnp.pad(G, ((0, Bp - B), (0, 0)))

    w1x, wg, b1, w2, b2 = (params["w1x"], params["wg"], params["b1"],
                           params["w2"], params["b2"])
    HT = w1x.shape[1]                      # H1 + H2 (256 at the toy dims)
    ZP = w2.shape[1]                       # packed output lanes (128)
    weights = [w1x, wg, b1, w2, b2]

    batch_spec = lambda d: pl.BlockSpec((TB, d), lambda i: (i, 0))
    full_spec = lambda a: pl.BlockSpec(a.shape, lambda i: (0,) * a.ndim)

    flops = 2 * Bp * ((X_dim + G_dim) * HT + HT * ZP)
    bytes_accessed = (sum(int(a.size) * a.dtype.itemsize
                          for a in [X, G] + weights)
                      + Bp * ZP * jnp.dtype(out_dtype).itemsize)

    zp = pl.pallas_call(
        _hidden_kernel,
        out_shape=jax.ShapeDtypeStruct((Bp, ZP), out_dtype),
        grid=(Bp // TB,),
        in_specs=[batch_spec(X_dim), batch_spec(G_dim)]
                 + [full_spec(a) for a in weights],
        out_specs=batch_spec(ZP),
        compiler_params=pltpu.CompilerParams(
            dimension_semantics=("parallel",)),
        cost_estimate=pl.CostEstimate(flops=flops, transcendentals=0,
                                      bytes_accessed=int(bytes_accessed)),
    )(X, G, *weights)
    return zp


# ---------------------------------------------------------------------------
# Parameter init (mimics nn.Linear uniform(-1/sqrt(fan_in), 1/sqrt(fan_in)))
# plus construction of the packed / zero-padded kernel weights.
# ---------------------------------------------------------------------------
def _init_linear(key, in_dim, out_dim, dtype=jnp.float32):
    kw, kb = jax.random.split(key)
    bound = float(in_dim) ** -0.5
    w = jax.random.uniform(kw, (in_dim, out_dim), dtype, -bound, bound)
    b = jax.random.uniform(kb, (1, out_dim), dtype, -bound, bound)
    return w, b


class HiddenPallas:
    def __init__(self, key, X_dim, G_dim, z1_dim, z2_dim, dtype=jnp.float32):
        self.X_dim, self.G_dim = X_dim, G_dim
        self.z1_dim, self.z2_dim = z1_dim, z2_dim

        concat = X_dim + G_dim
        H1 = _round_up(2 * concat, 128)          # hidden1 width, lane-padded
        H2 = _round_up(2 * G_dim, 128)           # hidden2 width, lane-padded
        HT = H1 + H2
        ZP = _round_up(z1_dim + z2_dim, 128)     # packed output lanes
        self.H1, self.H2, self.ZP = H1, H2, ZP

        k1, k2, k3, k4 = jax.random.split(key, 4)
        w1, b1 = _init_linear(k1, concat, 2 * concat, dtype)    # hidden1 L1
        w2, b2 = _init_linear(k2, 2 * concat, z1_dim, dtype)    # hidden1 L2
        v1, c1 = _init_linear(k3, G_dim, 2 * G_dim, dtype)      # hidden2 L1
        v2, c2 = _init_linear(k4, 2 * G_dim, z2_dim, dtype)     # hidden2 L2

        # Raw (unpadded) params kept for the pure-JAX reference check.
        self.raw_w1, self.raw_b1 = w1, b1
        self.raw_w2, self.raw_b2 = w2, b2
        self.raw_v1, self.raw_c1 = v1, c1
        self.raw_v2, self.raw_c2 = v2, c2

        # ---- packed layer-1 weights: hidden axis = [h1 block | h2 block] ----
        # X contributes only to the h1 block (zero elsewhere) -> torch.cat folded.
        w1x_p = jnp.zeros((X_dim, HT), dtype).at[:, :2 * concat].set(w1[:X_dim])
        wg_p = (jnp.zeros((G_dim, HT), dtype)
                .at[:, :2 * concat].set(w1[X_dim:])
                .at[:, H1:H1 + 2 * G_dim].set(v1))
        b1_p = (jnp.zeros((1, HT), dtype)
                .at[:, :2 * concat].set(b1)
                .at[:, H1:H1 + 2 * G_dim].set(c1))

        # ---- packed block-diagonal layer-2 weight -> one (HT, ZP) matmul ----
        w2_p = (jnp.zeros((HT, ZP), dtype)
                .at[:2 * concat, :z1_dim].set(w2)
                .at[H1:H1 + 2 * G_dim, z1_dim:z1_dim + z2_dim].set(v2))
        b2_p = (jnp.zeros((1, ZP), dtype)
                .at[:, :z1_dim].set(b2)
                .at[:, z1_dim:z1_dim + z2_dim].set(c2))

        self._packed = dict(w1x=w1x_p, wg=wg_p, b1=b1_p, w2=w2_p, b2=b2_p)

    def packed_params(self):
        return self._packed

    def forward_packed(self, X, G, **kw):
        """Packed (Bp, ZP) output; preferred entry point for fused consumers."""
        return hidden_forward_packed(X, G, self._packed, **kw)

    def __call__(self, X, G):
        B = X.shape[0]
        zp = self.forward_packed(X, G)
        # Slicing kept only to match the torch module's (z1, z2) signature;
        # downstream code should prefer forward_packed() to avoid this
        # HBM round-trip of the padded slab.
        z1 = zp[:B, :self.z1_dim]
        z2 = zp[:B, self.z1_dim:self.z1_dim + self.z2_dim]
        return z1, z2


# ---------------------------------------------------------------------------
# Pure-JAX reference (explicit concat, unpadded weights) for correctness.
# ---------------------------------------------------------------------------
def _reference(X, G, m):
    def mlp(x, w1, b1, w2, b2):
        h = x @ w1 + b1
        h = jnp.where(h > 0, h, 0.01 * h)
        return h @ w2 + b2
    inp = jnp.concatenate((X, G), axis=1)
    z1 = mlp(inp, m.raw_w1, m.raw_b1, m.raw_w2, m.raw_b2)
    z2 = mlp(G, m.raw_v1, m.raw_c1, m.raw_v2, m.raw_c2)
    return z1, z2


if __name__ == "__main__":
    key = jax.random.PRNGKey(0)
    k_params, k_x, k_g = jax.random.split(key, 3)

    B, X_dim, G_dim, z1_dim, z2_dim = 8, 16, 16, 8, 4
    model = HiddenPallas(k_params, X_dim, G_dim, z1_dim, z2_dim)

    X = jax.random.normal(k_x, (B, X_dim), jnp.float32)
    G = jax.random.normal(k_g, (B, G_dim), jnp.float32)

    z1, z2 = model(X, G)
    jax.block_until_ready((z1, z2))

    r1, r2 = _reference(X, G, model)
    assert z1.shape == (B, z1_dim) and z2.shape == (B, z2_dim)
    assert jnp.allclose(z1, r1, atol=1e-5), "z1 mismatch"
    assert jnp.allclose(z2, r2, atol=1e-5), "z2 mismatch"

    print("KERNEL_OK")
</pallas_src>

<mosaic_0001>
module attributes {stable_mosaic.version = 11 : i64} {
  func.func @_hidden_kernel(%arg0: i32, %arg1: memref<8x16xf32, #tpu.memory_space<vmem>>, %arg2: memref<8x16xf32, #tpu.memory_space<vmem>>, %arg3: memref<16x256xf32, #tpu.memory_space<vmem>>, %arg4: memref<16x256xf32, #tpu.memory_space<vmem>>, %arg5: memref<1x256xf32, #tpu.memory_space<vmem>>, %arg6: memref<256x128xf32, #tpu.memory_space<vmem>>, %arg7: memref<1x128xf32, #tpu.memory_space<vmem>>, %arg8: memref<8x128xf32, #tpu.memory_space<vmem>>) attributes {dimension_semantics = [#tpu.dimension_semantics<parallel>], iteration_bounds = array<i64: 1>, scalar_prefetch = 0 : i64, scratch_operands = 0 : i64, tpu.core_type = #tpu.core_type<tc>, window_params = [{transform_indices = @transform_0, window_bounds = array<i64: 8, 16>}, {transform_indices = @transform_1, window_bounds = array<i64: 8, 16>}, {pipeline_mode = #tpu.pipeline_mode<synchronous>, transform_indices = @transform_2, window_bounds = array<i64: 16, 256>}, {pipeline_mode = #tpu.pipeline_mode<synchronous>, transform_indices = @transform_3, window_bounds = array<i64: 16, 256>}, {pipeline_mode = #tpu.pipeline_mode<synchronous>, transform_indices = @transform_4, window_bounds = array<i64: 1, 256>}, {pipeline_mode = #tpu.pipeline_mode<synchronous>, transform_indices = @transform_5, window_bounds = array<i64: 256, 128>}, {pipeline_mode = #tpu.pipeline_mode<synchronous>, transform_indices = @transform_6, window_bounds = array<i64: 1, 128>}, {transform_indices = @transform_7, window_bounds = array<i64: 8, 128>}]} {
    %c0 = arith.constant 0 : index
    %c0_0 = arith.constant 0 : index
    %0 = vector.load %arg1[%c0, %c0_0] : memref<8x16xf32, #tpu.memory_space<vmem>>, vector<8x16xf32>
    %c0_1 = arith.constant 0 : index
    %c0_2 = arith.constant 0 : index
    %1 = vector.load %arg3[%c0_1, %c0_2] : memref<16x256xf32, #tpu.memory_space<vmem>>, vector<16x256xf32>
    %cst = arith.constant dense<0.000000e+00> : vector<8x256xf32>
    %2 = tpu.matmul %0, %1, %cst {dimension_numbers = #tpu.dot_dimension_numbers<[1], [0], [0], [1], [0, 0, 1, 1], [], []>} : vector<8x16xf32>, vector<16x256xf32>, vector<8x256xf32> -> vector<8x256xf32>
    %c0_3 = arith.constant 0 : index
    %c0_4 = arith.constant 0 : index
    %3 = vector.load %arg2[%c0_3, %c0_4] : memref<8x16xf32, #tpu.memory_space<vmem>>, vector<8x16xf32>
    %c0_5 = arith.constant 0 : index
    %c0_6 = arith.constant 0 : index
    %4 = vector.load %arg4[%c0_5, %c0_6] : memref<16x256xf32, #tpu.memory_space<vmem>>, vector<16x256xf32>
    %cst_7 = arith.constant dense<0.000000e+00> : vector<8x256xf32>
    %5 = tpu.matmul %3, %4, %cst_7 {dimension_numbers = #tpu.dot_dimension_numbers<[1], [0], [0], [1], [0, 0, 1, 1], [], []>} : vector<8x16xf32>, vector<16x256xf32>, vector<8x256xf32> -> vector<8x256xf32>
    %6 = arith.addf %2, %5 : vector<8x256xf32>
    %c0_8 = arith.constant 0 : index
    %c0_9 = arith.constant 0 : index
    %7 = vector.load %arg5[%c0_8, %c0_9] : memref<1x256xf32, #tpu.memory_space<vmem>>, vector<1x256xf32>
    %8 = vector.broadcast %7 : vector<1x256xf32> to vector<8x256xf32>
    %9 = arith.addf %6, %8 : vector<8x256xf32>
    %cst_10 = arith.constant 0.00999999977 : f32
    %10 = vector.broadcast %cst_10 : f32 to vector<8x256xf32>
    %11 = arith.mulf %10, %9 : vector<8x256xf32>
    %12 = arith.maximumf %9, %11 : vector<8x256xf32>
    %c0_11 = arith.constant 0 : index
    %c0_12 = arith.constant 0 : index
    %13 = vector.load %arg6[%c0_11, %c0_12] : memref<256x128xf32, #tpu.memory_space<vmem>>, vector<256x128xf32>
    %cst_13 = arith.constant dense<0.000000e+00> : vector<8x128xf32>
    %14 = tpu.matmul %12, %13, %cst_13 {dimension_numbers = #tpu.dot_dimension_numbers<[1], [0], [0], [1], [0, 0, 1, 1], [], []>} : vector<8x256xf32>, vector<256x128xf32>, vector<8x128xf32> -> vector<8x128xf32>
    %c0_14 = arith.constant 0 : index
    %c0_15 = arith.constant 0 : index
    %15 = vector.load %arg7[%c0_14, %c0_15] : memref<1x128xf32, #tpu.memory_space<vmem>>, vector<1x128xf32>
    %16 = vector.broadcast %15 : vector<1x128xf32> to vector<8x128xf32>
    %17 = arith.addf %14, %16 : vector<8x128xf32>
    %c0_16 = arith.constant 0 : index
    %c0_17 = arith.constant 0 : index
    %18 = vector.load %arg8[%c0_16, %c0_17] : memref<8x128xf32, #tpu.memory_space<vmem>>, vector<8x128xf32>
    tpu.vector_store %arg8[%c0_16, %c0_17], %17 {strides = array<i32>} : memref<8x128xf32, #tpu.memory_space<vmem>>, vector<8x128xf32>,
    return
  }
  func.func @transform_0(%arg0: i32) -> (i32, i32) {
    %c0_i32 = arith.constant 0 : i32
    %c0_i32_0 = arith.constant 0 : i32
    return %arg0, %c0_i32 : i32, i32
  }
  func.func @transform_1(%arg0: i32) -> (i32, i32) {
    %c0_i32 = arith.constant 0 : i32
    %c0_i32_0 = arith.constant 0 : i32
    return %arg0, %c0_i32 : i32, i32
  }
  func.func @transform_2(%arg0: i32) -> (i32, i32) {
    %c0_i32 = arith.constant 0 : i32
    %c0_i32_0 = arith.constant 0 : i32
    %c0_i32_1 = arith.constant 0 : i32
    return %c0_i32, %c0_i32_0 : i32, i32
  }
  func.func @transform_3(%arg0: i32) -> (i32, i32) {
    %c0_i32 = arith.constant 0 : i32
    %c0_i32_0 = arith.constant 0 : i32
    %c0_i32_1 = arith.constant 0 : i32
    return %c0_i32, %c0_i32_0 : i32, i32
  }
  func.func @transform_4(%arg0: i32) -> (i32, i32) {
    %c0_i32 = arith.constant 0 : i32
    %c0_i32_0 = arith.constant 0 : i32
    %c0_i32_1 = arith.constant 0 : i32
    return %c0_i32, %c0_i32_0 : i32, i32
  }
  func.func @transform_5(%arg0: i32) -> (i32, i32) {
    %c0_i32 = arith.constant 0 : i32
    %c0_i32_0 = arith.constant 0 : i32
    %c0_i32_1 = arith.constant 0 : i32
    return %c0_i32, %c0_i32_0 : i32, i32
  }
  func.func @transform_6(%arg0: i32) -> (i32, i32) {
    %c0_i32 = arith.constant 0 : i32
    %c0_i32_0 = arith.constant 0 : i32
    %c0_i32_1 = arith.constant 0 : i32
    return %c0_i32, %c0_i32_0 : i32, i32
  }
  func.func @transform_7(%arg0: i32) -> (i32, i32) {
    %c0_i32 = arith.constant 0 : i32
    %c0_i32_0 = arith.constant 0 : i32
    return %arg0, %c0_i32 : i32, i32
  }
}

</mosaic_0001>

<llo_original>
// kernel: tpu_custom_call.1
$region0: #{tpu_custom_call.1}
  #allocation0 [shape = 'u32[]', space=smem, size = 0x4, offset = 0x4, fixed_abs, tag = 'smem constant byte address 0x4 - core index']
  #allocation1 [shape = 'u32[144,128]{1,0:T(1,128)}', space=vmem, size = 0x12000, scoped, tag = 'internal scratch']
  %s0 = inlined_call_operand.hbm [shape: f32[8,16], index: 0, kind: input, shape index: {}]
  %s1 = inlined_call_operand.hbm [shape: f32[8,16], index: 1, kind: input, shape index: {}]
  %s2 = inlined_call_operand.hbm [shape: f32[16,256], index: 2, kind: input, shape index: {}]
  %s3 = inlined_call_operand.hbm [shape: f32[16,256], index: 3, kind: input, shape index: {}]
  %s4 = inlined_call_operand.vmem [shape: f32[1,256], index: 4, kind: input, shape index: {}]
  %s5 = inlined_call_operand.hbm [shape: f32[256,128], index: 5, kind: input, shape index: {}]
  %s6 = inlined_call_operand.vmem [shape: f32[1,128], index: 6, kind: input, shape index: {}]
  %s7 = inlined_call_operand.hbm [shape: f32[8,128], index: 7, kind: output, shape index: {}]
  %s8 = sld [smem:[#allocation0]]
  $region58: #{tpu_custom_call.1} parent=0
    _
  %s10 = ssub.s32 1, %s8
  %s11 = scalar_select 0, %s10, %s8
  $region1: #{tpu_custom_call.1} parent=0
    #allocation2 [shape = 'u8[4096]{0}', space=vmem, size = 0x1000, scoped, tag = 'input window, operand 0, single buffered']
    #allocation3 [shape = 's32[1]{0}', space=sflag, size = 0x4, scoped, tag = 'scoped memory for tpu_custom_call.1']
    #allocation4 [shape = 's32[1]{0}', space=sflag, size = 0x4, scoped, tag = 'scoped memory for tpu_custom_call.1']
    #allocation5 [shape = 'u8[4096]{0}', space=vmem, size = 0x1000, scoped, tag = 'input window, operand 1, single buffered']
    #allocation6 [shape = 's32[1]{0}', space=sflag, size = 0x4, scoped, tag = 'scoped memory for tpu_custom_call.1']
    #allocation7 [shape = 'u8[16384]{0}', space=vmem, size = 0x4000, scoped, tag = 'input window, operand 2, single buffered']
    #allocation8 [shape = 'u8[16384]{0}', space=vmem, size = 0x4000, scoped, tag = 'input window, operand 3, single buffered']
    #allocation9 [shape = 's32[1]{0}', space=sflag, size = 0x4, scoped, tag = 'scoped memory for tpu_custom_call.1']
    #allocation10 [shape = 'u8[131072]{0}', space=vmem, size = 0x20000, scoped, tag = 'input window, operand 5, single buffered']
    #allocation11 [shape = 'u8[4096]{0}', space=vmem, size = 0x1000, scoped, tag = 'output window, operand 0, single buffered']
    %12 = vsyncpa [#allocation3], 0
    %13 = vsyncpa [#allocation6], 0
    %14 = vsyncpa [#allocation9], 0
    %15 = vsyncpa [#allocation4], 0
    // Predicated region
    $region2: #{tpu_custom_call.1} parent=1 // pred_check
      _
    $region3: #{tpu_custom_call.1} parent=1 // pred_check_branch
      %17 = sbr.rel (0) target = $region5
    $region4: #{tpu_custom_call.1} parent=1 // pred_region
      %s19 = ssub.s32 128, 128
      %20 = vsyncadd [#allocation3], %s19
      %s22 = sshll.u32 [#allocation2], 4
      %s23 = int_to_ptr.vmem [resolvable:$true] %s22
      %25 = dma.hbm_to_vmem [thread:$0]  %s0, 128, %s23, [#allocation3]
    $region5: #{tpu_custom_call.1} parent=1 // pred_fallthru
      _
    // Predicated region
    $region6: #{tpu_custom_call.1} parent=1 // pred_check
      _
    $region7: #{tpu_custom_call.1} parent=1 // pred_check_branch
      %27 = sbr.rel (0) target = $region9
    $region8: #{tpu_custom_call.1} parent=1 // pred_region
      %s29 = ssub.s32 128, 128
      %30 = vsyncadd [#allocation6], %s29
      %s32 = sshll.u32 [#allocation5], 4
      %s33 = int_to_ptr.vmem [resolvable:$true] %s32
      %35 = dma.hbm_to_vmem [thread:$0]  %s1, 128, %s33, [#allocation6]
    $region9: #{tpu_custom_call.1} parent=1 // pred_fallthru
      _
    // Predicated region
    $region10: #{tpu_custom_call.1} parent=1 // pred_check
      _
    $region11: #{tpu_custom_call.1} parent=1 // pred_check_branch
      %37 = sbr.rel (0) target = $region13
    $region12: #{tpu_custom_call.1} parent=1 // pred_region
      %s39 = ssub.s32 512, 512
      %40 = vsyncadd [#allocation6], %s39
      %s41 = sshll.u32 [#allocation7], 4
      %s42 = int_to_ptr.vmem [resolvable:$true] %s41
      %47 = dma.hbm_to_vmem [thread:$0]  %s2, 512, %s42, [#allocation6], 256, 256, 16
    $region13: #{tpu_custom_call.1} parent=1 // pred_fallthru
      _
    // Predicated region
    $region14: #{tpu_custom_call.1} parent=1 // pred_check
      _
    $region15: #{tpu_custom_call.1} parent=1 // pred_check_branch
      %49 = sbr.rel (0) target = $region17
    $region16: #{tpu_custom_call.1} parent=1 // pred_region
      %s51 = ssub.s32 512, 512
      %52 = vsyncadd [#allocation9], %s51
      %s53 = sshll.u32 [#allocation8], 4
      %s54 = int_to_ptr.vmem [resolvable:$true] %s53
      %59 = dma.hbm_to_vmem [thread:$0]  %s3, 512, %s54, [#allocation9], 256, 256, 16
    $region17: #{tpu_custom_call.1} parent=1 // pred_fallthru
      _
    // Predicated region
    $region18: #{tpu_custom_call.1} parent=1 // pred_check
      _
    $region19: #{tpu_custom_call.1} parent=1 // pred_check_branch
      %61 = sbr.rel (0) target = $region21
    $region20: #{tpu_custom_call.1} parent=1 // pred_region
      _
    $region21: #{tpu_custom_call.1} parent=1 // pred_fallthru
      _
    // Predicated region
    $region22: #{tpu_custom_call.1} parent=1 // pred_check
      _
    $region23: #{tpu_custom_call.1} parent=1 // pred_check_branch
      %63 = sbr.rel (0) target = $region25
    $region24: #{tpu_custom_call.1} parent=1 // pred_region
      %s65 = ssub.s32 4096, 4096
      %66 = vsyncadd [#allocation9], %s65
      %s67 = sshll.u32 [#allocation10], 4
      %s68 = int_to_ptr.vmem [resolvable:$true] %s67
      %73 = dma.hbm_to_vmem [thread:$0]  %s5, 4096, %s68, [#allocation9], 128, 128, 8
    $region25: #{tpu_custom_call.1} parent=1 // pred_fallthru
      _
    // Predicated region
    $region26: #{tpu_custom_call.1} parent=1 // pred_check
      _
    $region27: #{tpu_custom_call.1} parent=1 // pred_check_branch
      %75 = sbr.rel (0) target = $region29
    $region28: #{tpu_custom_call.1} parent=1 // pred_region
      _
    $region29: #{tpu_custom_call.1} parent=1 // pred_fallthru
      _
    // Predicated region
    $region30: #{tpu_custom_call.1} parent=1 // pred_check
      _
    $region31: #{tpu_custom_call.1} parent=1 // pred_check_branch
      %77 = sbr.rel (0) target = $region33
    $region32: #{tpu_custom_call.1} parent=1 // pred_region
      %78 = dma.done [#allocation3], 128
    $region33: #{tpu_custom_call.1} parent=1 // pred_fallthru
      _
    // Predicated region
    $region34: #{tpu_custom_call.1} parent=1 // pred_check
      _
    $region35: #{tpu_custom_call.1} parent=1 // pred_check_branch
      %80 = sbr.rel (0) target = $region37
    $region36: #{tpu_custom_call.1} parent=1 // pred_region
      %81 = dma.done [#allocation6], 128
    $region37: #{tpu_custom_call.1} parent=1 // pred_fallthru
      _
    // Predicated region
    $region38: #{tpu_custom_call.1} parent=1 // pred_check
      _
    $region39: #{tpu_custom_call.1} parent=1 // pred_check_branch
      %83 = sbr.rel (0) target = $region41
    $region40: #{tpu_custom_call.1} parent=1 // pred_region
      %84 = dma.done [#allocation6], 512
    $region41: #{tpu_custom_call.1} parent=1 // pred_fallthru
      _
    // Predicated region
    $region42: #{tpu_custom_call.1} parent=1 // pred_check
      _
    $region43: #{tpu_custom_call.1} parent=1 // pred_check_branch
      %86 = sbr.rel (0) target = $region45
    $region44: #{tpu_custom_call.1} parent=1 // pred_region
      %87 = dma.done [#allocation9], 512
    $region45: #{tpu_custom_call.1} parent=1 // pred_fallthru
      _
    // Predicated region
    $region46: #{tpu_custom_call.1} parent=1 // pred_check
      _
    $region47: #{tpu_custom_call.1} parent=1 // pred_check_branch
      %89 = sbr.rel (0) target = $region49
    $region48: #{tpu_custom_call.1} parent=1 // pred_region
      %90 = dma.done [#allocation9], 4096
    $region49: #{tpu_custom_call.1} parent=1 // pred_fallthru
      _
    %v91 = vld [vmem:[#allocation2] sm:$0xff]
    %v92 = vld [vmem:[#allocation7] sm:$0xff]
    %v93 = vld [vmem:[#allocation7 + $0x8] sm:$0xff]
    %v94 = vld [vmem:[#allocation7 + $0x10] sm:$0xff]
    %v95 = vld [vmem:[#allocation7 + $0x18] sm:$0xff]
    %v96 = vld [vmem:[#allocation5] sm:$0xff]
    %v97 = vld [vmem:[#allocation8] sm:$0xff]
    %v98 = vld [vmem:[#allocation8 + $0x8] sm:$0xff]
    %v99 = vld [vmem:[#allocation8 + $0x10] sm:$0xff]
    %v100 = vld [vmem:[#allocation8 + $0x18] sm:$0xff]
    %vm101 = vcmask 130048
    %v103 = vsel %vm101, %v96, 0
    %105 = vmatprep.subr.mxu0 %v98
    %106 = vmatpush1.msra.mxu0 %v97
    %107 = vmatprep.subr.mxu0 %v100
    %108 = vmatpush1.msra.mxu0 %v99
    %109 = vmatprep.subr.mxu0 0.0
    %110 = vmatpush1.msra.mxu0 0.0
    %111 = vmatprep.subr.mxu0 0.0
    %112 = vmatpush1.msra.mxu0 0.0
    %113 = vmatprep.subr.mxu0 0.0
    %114 = vmatpush1.msra.mxu0 0.0
    %115 = vmatprep.subr.mxu0 0.0
    %116 = vmatpush1.msra.mxu0 0.0
    %117 = vmatprep.subr.mxu0 0.0
    %118 = vmatpush1.msra.mxu0 0.0
    %119 = vmatprep.subr.mxu0 0.0
    %120 = vmatpush1.msra.mxu0 0.0
    %121 = vmatprep.subr.mxu0 0.0
    %122 = vmatpush1.msra.mxu0 0.0
    %123 = vmatprep.subr.mxu0 0.0
    %124 = vmatpush1.msra.mxu0 0.0
    %125 = vmatprep.subr.mxu0 0.0
    %126 = vmatpush1.msra.mxu0 0.0
    %127 = vmatprep.subr.mxu0 0.0
    %128 = vmatpush1.msra.mxu0 0.0
    %129 = vmatprep.subr.mxu0 0.0
    %130 = vmatpush1.msra.mxu0 0.0
    %131 = vmatprep.subr.mxu0 0.0
    %132 = vmatpush1.msra.mxu0 0.0
    %133 = vmatprep.subr.mxu0 0.0
    %134 = vmatpush1.msra.mxu0 0.0
    %135 = vmatprep.subr.mxu0 0.0
    %136 = vmatpush1.msra.mxu0 0.0
    %137 = vmatprep.subr.mxu0 0.0
    %138 = vmatpush1.msra.mxu0 0.0
    %139 = vmatprep.subr.mxu0 0.0
    %140 = vmatpush1.msra.mxu0 0.0
    %141 = vmatprep.subr.mxu0 0.0
    %142 = vmatpush1.msra.mxu0 0.0
    %143 = vmatprep.subr.mxu0 0.0
    %144 = vmatpush1.msra.mxu0 0.0
    %145 = vmatprep.subr.mxu0 0.0
    %146 = vmatpush1.msra.mxu0 0.0
    %147 = vmatprep.subr.mxu0 0.0
    %148 = vmatpush1.msra.mxu0 0.0
    %149 = vmatprep.subr.mxu0 0.0
    %150 = vmatpush1.msra.mxu0 0.0
    %151 = vmatprep.subr.mxu0 0.0
    %152 = vmatpush1.msra.mxu0 0.0
    %153 = vmatprep.subr.mxu0 0.0
    %154 = vmatpush1.msra.mxu0 0.0
    %155 = vmatprep.subr.mxu0 0.0
    %156 = vmatpush1.msra.mxu0 0.0
    %157 = vmatprep.subr.mxu0 0.0
    %158 = vmatpush1.msra.mxu0 0.0
    %159 = vmatprep.subr.mxu0 0.0
    %160 = vmatpush1.msra.mxu0 0.0
    %161 = vmatprep.subr.mxu0 0.0
    %162 = vmatpush1.msra.mxu0 0.0
    %163 = vmatprep.subr.mxu0 0.0
    %164 = vmatpush1.msra.mxu0 0.0
    %165 = vmatprep.subr.mxu0 0.0
    %166 = vmatpush1.msra.mxu0 0.0
    %167 = vmatprep.subr.mxu0 0.0
    %168 = vmatpush1.msra.mxu0 0.0
    %169 = vmatprep.mubr.f32.mxu0 0.0
    %170 = vmatmul.mubr.f32.gmra.mrb[0].mxu0 %v103
    %v171 = vpop.f32.mrb[0].mxu0
    %v172 = vadd.f32 0.0, %v171
    %v173 = vpop.f32.mrb[0].mxu0
    %v174 = vadd.f32 0.0, %v173
    %175 = vdwg.mxu0
    %v177 = vsel %vm101, %v91, 0
    %179 = vmatprep.subr.mxu0 %v93
    %180 = vmatpush1.msra.mxu0 %v92
    %181 = vmatprep.subr.mxu0 %v95
    %182 = vmatpush1.msra.mxu0 %v94
    %183 = vmatprep.subr.mxu0 0.0
    %184 = vmatpush1.msra.mxu0 0.0
    %185 = vmatprep.subr.mxu0 0.0
    %186 = vmatpush1.msra.mxu0 0.0
    %187 = vmatprep.subr.mxu0 0.0
    %188 = vmatpush1.msra.mxu0 0.0
    %189 = vmatprep.subr.mxu0 0.0
    %190 = vmatpush1.msra.mxu0 0.0
    %191 = vmatprep.subr.mxu0 0.0
    %192 = vmatpush1.msra.mxu0 0.0
    %193 = vmatprep.subr.mxu0 0.0
    %194 = vmatpush1.msra.mxu0 0.0
    %195 = vmatprep.subr.mxu0 0.0
    %196 = vmatpush1.msra.mxu0 0.0
    %197 = vmatprep.subr.mxu0 0.0
    %198 = vmatpush1.msra.mxu0 0.0
    %199 = vmatprep.subr.mxu0 0.0
    %200 = vmatpush1.msra.mxu0 0.0
    %201 = vmatprep.subr.mxu0 0.0
    %202 = vmatpush1.msra.mxu0 0.0
    %203 = vmatprep.subr.mxu0 0.0
    %204 = vmatpush1.msra.mxu0 0.0
    %205 = vmatprep.subr.mxu0 0.0
    %206 = vmatpush1.msra.mxu0 0.0
    %207 = vmatprep.subr.mxu0 0.0
    %208 = vmatpush1.msra.mxu0 0.0
    %209 = vmatprep.subr.mxu0 0.0
    %210 = vmatpush1.msra.mxu0 0.0
    %211 = vmatprep.subr.mxu0 0.0
    %212 = vmatpush1.msra.mxu0 0.0
    %213 = vmatprep.subr.mxu0 0.0
    %214 = vmatpush1.msra.mxu0 0.0
    %215 = vmatprep.subr.mxu0 0.0
    %216 = vmatpush1.msra.mxu0 0.0
    %217 = vmatprep.subr.mxu0 0.0
    %218 = vmatpush1.msra.mxu0 0.0
    %219 = vmatprep.subr.mxu0 0.0
    %220 = vmatpush1.msra.mxu0 0.0
    %221 = vmatprep.subr.mxu0 0.0
    %222 = vmatpush1.msra.mxu0 0.0
    %223 = vmatprep.subr.mxu0 0.0
    %224 = vmatpush1.msra.mxu0 0.0
    %225 = vmatprep.subr.mxu0 0.0
    %226 = vmatpush1.msra.mxu0 0.0
    %227 = vmatprep.subr.mxu0 0.0
    %228 = vmatpush1.msra.mxu0 0.0
    %229 = vmatprep.subr.mxu0 0.0
    %230 = vmatpush1.msra.mxu0 0.0
    %231 = vmatprep.subr.mxu0 0.0
    %232 = vmatpush1.msra.mxu0 0.0
    %233 = vmatprep.subr.mxu0 0.0
    %234 = vmatpush1.msra.mxu0 0.0
    %235 = vmatprep.subr.mxu0 0.0
    %236 = vmatpush1.msra.mxu0 0.0
    %237 = vmatprep.subr.mxu0 0.0
    %238 = vmatpush1.msra.mxu0 0.0
    %239 = vmatprep.subr.mxu0 0.0
    %240 = vmatpush1.msra.mxu0 0.0
    %241 = vmatprep.subr.mxu0 0.0
    %242 = vmatpush1.msra.mxu0 0.0
    %243 = vmatprep.mubr.f32.mxu0 0.0
    %244 = vmatmul.mubr.f32.gmra.mrb[0].mxu0 %v177
    %v245 = vpop.f32.mrb[0].mxu0
    %v246 = vadd.f32 %v172, %v245
    %v247 = vpop.f32.mrb[0].mxu0
    %v248 = vadd.f32 %v174, %v247
    %249 = vdwg.mxu0
    %v250 = vld [vmem:[%s4] sm:$0x3]
    %v252 = vlaneseq
    %v253 = vshrl.u32 %v252, 7
    %v254 = vsub.s32 0, %v253
    %v255 = vrot.slane %v250, %v254
    %v256 = vlaneseq
    %v257 = vshrl.u32 %v256, 7
    %v258 = vsub.s32 1, %v257
    %v259 = vrot.slane %v250, %v258
    %v262 = vadd.f32 %v246, %v255
    %v263 = vadd.f32 %v248, %v259
    %v264 = vmul.f32 %v262, 0.01
    %v265 = vmul.f32 %v263, 0.01
    %v266 = vmax.f32 %v262, %v264
    %v267 = vmax.f32 %v263, %v265
    %v268 = vld [vmem:[#allocation10] sm:$0xff]
    %v269 = vld [vmem:[#allocation10 + $0x8] sm:$0xff]
    %v270 = vld [vmem:[#allocation10 + $0x10] sm:$0xff]
    %v271 = vld [vmem:[#allocation10 + $0x18] sm:$0xff]
    %v272 = vld [vmem:[#allocation10 + $0x20] sm:$0xff]
    %v273 = vld [vmem:[#allocation10 + $0x28] sm:$0xff]
    %v274 = vld [vmem:[#allocation10 + $0x30] sm:$0xff]
    %v275 = vld [vmem:[#allocation10 + $0x38] sm:$0xff]
    %v276 = vld [vmem:[#allocation10 + $0x40] sm:$0xff]
    %v277 = vld [vmem:[#allocation10 + $0x48] sm:$0xff]
    %v278 = vld [vmem:[#allocation10 + $0x50] sm:$0xff]
    %v279 = vld [vmem:[#allocation10 + $0x58] sm:$0xff]
    %v280 = vld [vmem:[#allocation10 + $0x60] sm:$0xff]
    %v281 = vld [vmem:[#allocation10 + $0x68] sm:$0xff]
    %v282 = vld [vmem:[#allocation10 + $0x70] sm:$0xff]
    %v283 = vld [vmem:[#allocation10 + $0x78] sm:$0xff]
    %v284 = vld [vmem:[#allocation10 + $0x80] sm:$0xff]
    %v285 = vld [vmem:[#allocation10 + $0x88] sm:$0xff]
    %v286 = vld [vmem:[#allocation10 + $0x90] sm:$0xff]
    %v287 = vld [vmem:[#allocation10 + $0x98] sm:$0xff]
    %v288 = vld [vmem:[#allocation10 + $0xa0] sm:$0xff]
    %v289 = vld [vmem:[#allocation10 + $0xa8] sm:$0xff]
    %v290 = vld [vmem:[#allocation10 + $0xb0] sm:$0xff]
    %v291 = vld [vmem:[#allocation10 + $0xb8] sm:$0xff]
    %v292 = vld [vmem:[#allocation10 + $0xc0] sm:$0xff]
    %v293 = vld [vmem:[#allocation10 + $0xc8] sm:$0xff]
    %v294 = vld [vmem:[#allocation10 + $0xd0] sm:$0xff]
    %v295 = vld [vmem:[#allocation10 + $0xd8] sm:$0xff]
    %v296 = vld [vmem:[#allocation10 + $0xe0] sm:$0xff]
    %v297 = vld [vmem:[#allocation10 + $0xe8] sm:$0xff]
    %v298 = vld [vmem:[#allocation10 + $0xf0] sm:$0xff]
    %v299 = vld [vmem:[#allocation10 + $0xf8] sm:$0xff]
    %v300 = vld [vmem:[%s6] sm:$0x1]
    %v302 = vlaneseq
    %v303 = vshrl.u32 %v302, 7
    %v304 = vsub.s32 0, %v303
    %v305 = vrot.slane %v300, %v304
    %307 = vmatprep.subr.mxu0 0.0
    %308 = vmatpush1.msra.mxu0 %v268
    %309 = vmatprep.subr.mxu0 0.0
    %310 = vmatpush1.msra.mxu0 %v269
    %311 = vmatprep.subr.mxu0 0.0
    %312 = vmatpush1.msra.mxu0 %v270
    %313 = vmatprep.subr.mxu0 0.0
    %314 = vmatpush1.msra.mxu0 %v271
    %315 = vmatprep.subr.mxu0 0.0
    %316 = vmatpush1.msra.mxu0 %v272
    %317 = vmatprep.subr.mxu0 0.0
    %318 = vmatpush1.msra.mxu0 %v273
    %319 = vmatprep.subr.mxu0 0.0
    %320 = vmatpush1.msra.mxu0 %v274
    %321 = vmatprep.subr.mxu0 0.0
    %322 = vmatpush1.msra.mxu0 %v275
    %323 = vmatprep.subr.mxu0 0.0
    %324 = vmatpush1.msra.mxu0 %v276
    %325 = vmatprep.subr.mxu0 0.0
    %326 = vmatpush1.msra.mxu0 %v277
    %327 = vmatprep.subr.mxu0 0.0
    %328 = vmatpush1.msra.mxu0 %v278
    %329 = vmatprep.subr.mxu0 0.0
    %330 = vmatpush1.msra.mxu0 %v279
    %331 = vmatprep.subr.mxu0 0.0
    %332 = vmatpush1.msra.mxu0 %v280
    %333 = vmatprep.subr.mxu0 0.0
    %334 = vmatpush1.msra.mxu0 %v281
    %335 = vmatprep.subr.mxu0 0.0
    %336 = vmatpush1.msra.mxu0 %v282
    %337 = vmatprep.subr.mxu0 0.0
    %338 = vmatpush1.msra.mxu0 %v283
    %339 = vmatprep.subr.mxu0 0.0
    %340 = vmatpush1.msra.mxu0 %v284
    %341 = vmatprep.subr.mxu0 0.0
    %342 = vmatpush1.msra.mxu0 %v285
    %343 = vmatprep.subr.mxu0 0.0
    %344 = vmatpush1.msra.mxu0 %v286
    %345 = vmatprep.subr.mxu0 0.0
    %346 = vmatpush1.msra.mxu0 %v287
    %347 = vmatprep.subr.mxu0 0.0
    %348 = vmatpush1.msra.mxu0 %v288
    %349 = vmatprep.subr.mxu0 0.0
    %350 = vmatpush1.msra.mxu0 %v289
    %351 = vmatprep.subr.mxu0 0.0
    %352 = vmatpush1.msra.mxu0 %v290
    %353 = vmatprep.subr.mxu0 0.0
    %354 = vmatpush1.msra.mxu0 %v291
    %355 = vmatprep.subr.mxu0 0.0
    %356 = vmatpush1.msra.mxu0 %v292
    %357 = vmatprep.subr.mxu0 0.0
    %358 = vmatpush1.msra.mxu0 %v293
    %359 = vmatprep.subr.mxu0 0.0
    %360 = vmatpush1.msra.mxu0 %v294
    %361 = vmatprep.subr.mxu0 0.0
    %362 = vmatpush1.msra.mxu0 %v295
    %363 = vmatprep.subr.mxu0 0.0
    %364 = vmatpush1.msra.mxu0 %v296
    %365 = vmatprep.subr.mxu0 0.0
    %366 = vmatpush1.msra.mxu0 %v297
    %367 = vmatprep.subr.mxu0 0.0
    %368 = vmatpush1.msra.mxu0 %v298
    %369 = vmatprep.subr.mxu0 0.0
    %370 = vmatpush1.msra.mxu0 %v299
    %371 = vmatprep.mubr.f32.mxu0 %v267
    %372 = vmatmul.mubr.f32.gmra.mrb[0].mxu0 %v266
    %v373 = vpop.f32.mrb[0].mxu0
    %v374 = vadd.f32 %v305, %v373
    %v375 = vpop.f32.mrb[0].mxu0
    %376 = vdwg.mxu0
    %377 = vst [vmem:[#allocation11] sm:$0xff] %v374
    // Predicated region
    $region50: #{tpu_custom_call.1} parent=1 // pred_check
      _
    $region51: #{tpu_custom_call.1} parent=1 // pred_check_branch
      %379 = sbr.rel (0) target = $region53
    $region52: #{tpu_custom_call.1} parent=1 // pred_region
      %s381 = ssub.s32 128, 128
      %382 = vsyncadd [#allocation4], %s381
      %s384 = sshll.u32 [#allocation11], 4
      %s385 = int_to_ptr.vmem [resolvable:$true] %s384
      %387 = dma.vmem_to_hbm [thread:$0]  %s385, 128, %s7, [#allocation4]
    $region53: #{tpu_custom_call.1} parent=1 // pred_fallthru
      _
    // Predicated region
    $region54: #{tpu_custom_call.1} parent=1 // pred_check
      _
    $region55: #{tpu_custom_call.1} parent=1 // pred_check_branch
      %389 = sbr.rel (0) target = $region57
    $region56: #{tpu_custom_call.1} parent=1 // pred_region
      %390 = dma.done [#allocation4], 128
    $region57: #{tpu_custom_call.1} parent=1 // pred_fallthru
      _
    %391 = vsyncpa [#allocation3], 1
    %392 = vsyncpa [#allocation6], 1
    %393 = vsyncpa [#allocation9], 1
    %394 = vsyncpa [#allocation4], 1

</llo_original>
